<compile_context>
chip_gen: v5e
topology: v5e:2x2
jax: 0.10.0
libtpu: 0.0.40
codegen_flags: <defaults>
</compile_context>

<pallas_src>
import jax
import jax.numpy as jnp
from jax.experimental import pallas as pl
from jax.experimental.pallas import tpu as pltpu  # noqa: F401  (TPU backend)


def _policy_kernel(wb_ref, o_ref):
    # wb_ref: VMEM (2, OUT) -- row 0 = W[:, 0] (weight column), row 1 = bias.
    # o_ref : VMEM (1, OUT) -- output row.
    # Constant input x = 1.0 is folded: y = W[:, 0] * 1.0 + b = W[:, 0] + b.
    o_ref[...] = wb_ref[0:1, :] + wb_ref[1:2, :]


def pack_params(weight: jax.Array, bias: jax.Array) -> jax.Array:
    """One-time layout: (out_features, 1) weight + (out_features,) bias
    -> single lane-major (2, out_features) f32 slab (row 0 = W[:,0], row 1 = b)."""
    out_features = weight.shape[0]
    w_row = weight.astype(jnp.float32).T.reshape(1, out_features)
    b_row = bias.astype(jnp.float32).reshape(1, out_features)
    return jnp.concatenate([w_row, b_row], axis=0)  # (2, OUT)


@jax.jit
def policy_forward(wb_packed: jax.Array) -> jax.Array:
    """wb_packed: (2, out_features) f32 -> (out_features,) f32 output.
    Equivalent to Linear(1, out_features) applied to the constant input [1.0]."""
    out_features = wb_packed.shape[1]
    y = pl.pallas_call(
        _policy_kernel,
        out_shape=jax.ShapeDtypeStruct((1, out_features), jnp.float32),
        in_specs=[pl.BlockSpec((2, out_features), lambda: (0, 0))],
        out_specs=pl.BlockSpec((1, out_features), lambda: (0, 0)),
    )(wb_packed)
    return y.reshape(out_features)


if __name__ == "__main__":
    # Deterministic parameter init matching nn.Linear(1, 2) shapes:
    #   weight (2, 1), bias (2,), PyTorch-style uniform bound 1/sqrt(in_features)=1.
    key = jax.random.PRNGKey(0)
    k_w, k_b = jax.random.split(key)
    weight = jax.random.uniform(k_w, (2, 1), jnp.float32, minval=-1.0, maxval=1.0)
    bias = jax.random.uniform(k_b, (2,), jnp.float32, minval=-1.0, maxval=1.0)

    # Parameters are laid out once (persistent lane-major slab); the forward
    # itself is a single grid-less pallas_call with one VMEM operand.
    wb = jax.block_until_ready(pack_params(weight, bias))

    out = jax.block_until_ready(policy_forward(wb))

    # Reference check in plain JAX: Linear(1, 2) applied to the constant [1.0].
    x = jnp.array([1.0], dtype=jnp.float32)
    ref = (weight @ x.reshape(1, 1)).reshape(-1) + bias
    assert out.shape == (2,), out.shape
    assert out.dtype == jnp.float32, out.dtype
    assert jnp.allclose(out, ref, atol=1e-6), (out, ref)

    print("KERNEL_OK")
</pallas_src>

<mosaic_0001>
module attributes {stable_mosaic.version = 11 : i64} {
  func.func @_policy_kernel(%arg0: memref<2x2xf32, #tpu.memory_space<vmem>>, %arg1: memref<1x2xf32, #tpu.memory_space<vmem>>) attributes {dimension_semantics = [], scalar_prefetch = 0 : i64, scratch_operands = 0 : i64, tpu.core_type = #tpu.core_type<tc>} {
    %c0 = arith.constant 0 : index
    %c0_0 = arith.constant 0 : index
    %0 = vector.load %arg0[%c0, %c0_0] : memref<2x2xf32, #tpu.memory_space<vmem>>, vector<1x2xf32>
    %c1 = arith.constant 1 : index
    %c0_1 = arith.constant 0 : index
    %1 = vector.load %arg0[%c1, %c0_1] : memref<2x2xf32, #tpu.memory_space<vmem>>, vector<1x2xf32>
    %2 = arith.addf %0, %1 : vector<1x2xf32>
    %c0_2 = arith.constant 0 : index
    %c0_3 = arith.constant 0 : index
    %3 = vector.load %arg1[%c0_2, %c0_3] : memref<1x2xf32, #tpu.memory_space<vmem>>, vector<1x2xf32>
    tpu.vector_store %arg1[%c0_2, %c0_3], %2 {strides = array<i32>} : memref<1x2xf32, #tpu.memory_space<vmem>>, vector<1x2xf32>,
    return
  }
}

</mosaic_0001>

<llo_original>
// kernel: policy_forward.1
$region0: #{policy_forward.1}
  #allocation0 [shape = 'u32[]', space=smem, size = 0x4, offset = 0x4, fixed_abs, tag = 'smem constant byte address 0x4 - core index']
  #allocation1 [shape = 'u32[72,128]{1,0:T(1,128)}', space=vmem, size = 0x9000, scoped, tag = 'internal scratch']
  %s0 = inlined_call_operand.hbm [shape: f32[2,2], index: 0, kind: input, shape index: {}]
  %s1 = inlined_call_operand.hbm [shape: f32[1,2], index: 1, kind: output, shape index: {}]
  %s2 = sld [smem:[#allocation0]]
  $region18: #{policy_forward.1} parent=0
    _
  %s4 = ssub.s32 1, %s2
  %s5 = scalar_select 0, %s4, %s2
  $region1: #{policy_forward.1} parent=0
    #allocation2 [shape = 'u8[1024]{0}', space=vmem, size = 0x400, scoped, tag = 'input window, operand 0, single buffered']
    #allocation3 [shape = 's32[1]{0}', space=sflag, size = 0x4, scoped, tag = 'scoped memory for policy_forward.1']
    #allocation4 [shape = 's32[1]{0}', space=sflag, size = 0x4, scoped, tag = 'scoped memory for policy_forward.1']
    #allocation5 [shape = 'u8[512]{0}', space=vmem, size = 0x400, scoped, tag = 'output window, operand 0, single buffered']
    %6 = vsyncpa [#allocation3], 0
    %7 = vsyncpa [#allocation4], 0
    // Predicated region
    $region2: #{policy_forward.1} parent=1 // pred_check
      _
    $region3: #{policy_forward.1} parent=1 // pred_check_branch
      %9 = sbr.rel (0) target = $region5
    $region4: #{policy_forward.1} parent=1 // pred_region
      %11 = vsyncadd [#allocation3], 0
      %s13 = sshll.u32 %s0, 4
      %s14 = int_to_ptr.hbm [resolvable:$true] %s13
      %s15 = sshll.u32 [#allocation2], 4
      %s16 = int_to_ptr.vmem [resolvable:$true] %s15
      %18 = dma.hbm_to_vmem [thread:$0]  %s14, 32, %s16, [#allocation3]
    $region5: #{policy_forward.1} parent=1 // pred_fallthru
      _
    // Predicated region
    $region6: #{policy_forward.1} parent=1 // pred_check
      _
    $region7: #{policy_forward.1} parent=1 // pred_check_branch
      %20 = sbr.rel (0) target = $region9
    $region8: #{policy_forward.1} parent=1 // pred_region
      %22 = dma.done [#allocation3], 32
    $region9: #{policy_forward.1} parent=1 // pred_fallthru
      _
    %v23 = vld [vmem:[#allocation2] sm:$0x1]
    %v24 = vld [vmem:[#allocation2 + $0x1] sm:$0x1]
    %v25 = vadd.f32 %v23, %v24
    %vm26 = vcmask 8192
    %27 = vst.msk [vmem:[#allocation5] sm:$0x1] %vm26, %v25
    // Predicated region
    $region10: #{policy_forward.1} parent=1 // pred_check
      _
    $region11: #{policy_forward.1} parent=1 // pred_check_branch
      %29 = sbr.rel (0) target = $region13
    $region12: #{policy_forward.1} parent=1 // pred_region
      %31 = vsyncadd [#allocation4], 0
      %s33 = sshll.u32 [#allocation5], 4
      %s34 = int_to_ptr.vmem [resolvable:$true] %s33
      %s35 = sshll.u32 %s1, 4
      %s36 = int_to_ptr.hbm [resolvable:$true] %s35
      %38 = dma.vmem_to_hbm [thread:$0]  %s34, 16, %s36, [#allocation4]
    $region13: #{policy_forward.1} parent=1 // pred_fallthru
      _
    // Predicated region
    $region14: #{policy_forward.1} parent=1 // pred_check
      _
    $region15: #{policy_forward.1} parent=1 // pred_check_branch
      %40 = sbr.rel (0) target = $region17
    $region16: #{policy_forward.1} parent=1 // pred_region
      %42 = dma.done [#allocation4], 16
    $region17: #{policy_forward.1} parent=1 // pred_fallthru
      _
    %43 = vsyncpa [#allocation3], 1
    %44 = vsyncpa [#allocation4], 1

</llo_original>
